<compile_context>
chip_gen: v5e
topology: v5e:2x2
jax: 0.10.0
libtpu: 0.0.40
codegen_flags: <defaults>
</compile_context>

<pallas_src>
import functools

import jax
import jax.numpy as jnp
from jax.experimental import pallas as pl
from jax.scipy.linalg import block_diag


def _msa_kernel(x_ref, w_ref, b_ref, o_ref, *, n_heads, d_head):
    """x_ref: (B, S, D) f32; w_ref: (D, 3D) bf16 block-diagonal packed weight
    (softmax scale pre-folded into the Q block); b_ref: (1, 3D) f32 bias;
    o_ref: (B, S, D) f32."""
    B, S, D = x_ref.shape
    H, dh = n_heads, d_head

    # ---- Fused Q/K/V projection: ONE bf16 MXU matmul for every (batch, seq,
    # head) triple, f32 accumulation, f32 bias add.  Column layout of w_ref is
    # [Q(all heads) | K(all heads) | V(all heads)], block-diagonal per head, so
    # this reproduces the per-head nn.Linear(d_head, d_head) exactly.
    x2 = x_ref[...].reshape(B * S, D).astype(jnp.bfloat16)
    qkv = jnp.dot(x2, w_ref[...],
                  preferred_element_type=jnp.float32) + b_ref[...]   # (B*S, 3D) f32

    # ---- Fold heads into a single (H*B) batch dim so the whole attention runs
    # as TWO batched dot_generals + ONE softmax pass (instead of an H-unrolled
    # chain of tiny matmuls).  Only lane slices, leading-axis concat and
    # leading-dim reshapes are used.
    def head_batch(col0):
        parts = [qkv[:, col0 + h * dh: col0 + (h + 1) * dh].reshape(1, B * S, dh)
                 for h in range(H)]
        # axis-0 index of the result == h * B + b
        return jnp.concatenate(parts, axis=0).reshape(H * B, S, dh)

    q = head_batch(0)          # (H*B, S, dh)   -- 1/sqrt(dh) already folded in
    k = head_batch(D)          # (H*B, S, dh)
    v = head_batch(2 * D)      # (H*B, S, dh)

    # scores[g, i, j] = <q[g, i], k[g, j]>  (batched over g = h*B + b)
    scores = jnp.einsum("gqd,gkd->gqk", q, k,
                        preferred_element_type=jnp.float32)          # (H*B, S, S)

    # Numerically stable softmax over the last axis (== nn.Softmax(dim=-1)),
    # all f32, EXACT reciprocal (approx EUP reciprocal removed per feedback).
    scores = scores - jnp.max(scores, axis=-1, keepdims=True)
    p = jnp.exp(scores)
    attn = p * pl.reciprocal(jnp.sum(p, axis=-1, keepdims=True), approx=False)

    # context = attn @ v : bf16 MXU operands, f32 accumulation.
    ctx = jnp.einsum("gqk,gkd->gqd",
                     attn.astype(jnp.bfloat16), v.astype(jnp.bfloat16),
                     preferred_element_type=jnp.float32)             # (H*B, S, dh)

    # torch.hstack of the head outputs -> one (B, S, [head0 | head1 | ...]) store.
    o_ref[...] = jnp.concatenate(
        [ctx[h * B:(h + 1) * B] for h in range(H)], axis=-1).astype(o_ref.dtype)


def pack_msa_params(wq, bq, wk, bk, wv, bv, *, mxu_dtype=jnp.bfloat16):
    """One-off parameter packing, hoisted OUT of the per-call forward path.

    w*: (H, dh, dh) per-head Linear weights in (in, out) orientation; b*: (H, dh).
    Returns (w_packed (D, 3D) in mxu_dtype, b_packed (1, 3D) f32) with the
    1/sqrt(d_head) softmax scale folded into the Q block."""
    H, dh, _ = wq.shape
    D = H * dh
    scale = 1.0 / (dh ** 0.5)

    wq_bd = block_diag(*(wq[h] for h in range(H))) * scale   # (D, D)
    wk_bd = block_diag(*(wk[h] for h in range(H)))           # (D, D)
    wv_bd = block_diag(*(wv[h] for h in range(H)))           # (D, D)
    w_packed = jnp.concatenate([wq_bd, wk_bd, wv_bd], axis=1).astype(mxu_dtype)

    b_packed = jnp.concatenate(
        [bq.reshape(-1) * scale, bk.reshape(-1), bv.reshape(-1)]
    ).reshape(1, 3 * D).astype(jnp.float32)
    return w_packed, b_packed


@functools.partial(jax.jit, static_argnames=("n_heads",))
def msa_forward(x, w_packed, b_packed, *, n_heads):
    """x: (B, S, D).  Returns (B, S, D), identical to MSA.forward."""
    B, S, D = x.shape
    assert D % n_heads == 0
    dh = D // n_heads

    # Single gridless invocation: the whole working set is a few KiB, so
    # everything lives in VMEM with no per-step pipeline overhead and no
    # redundant weight re-fetches.  (See header note for production-scale
    # gridding / flash-style tiling.)
    return pl.pallas_call(
        functools.partial(_msa_kernel, n_heads=n_heads, d_head=dh),
        out_shape=jax.ShapeDtypeStruct((B, S, D), x.dtype),
    )(x, w_packed, b_packed)


def _reference(x, wq, bq, wk, bk, wv, bv, n_heads):
    B, S, D = x.shape
    dh = D // n_heads
    outs = []
    for b in range(B):
        heads = []
        for h in range(n_heads):
            seq = x[b, :, h * dh:(h + 1) * dh]
            q = seq @ wq[h] + bq[h]
            k = seq @ wk[h] + bk[h]
            v = seq @ wv[h] + bv[h]
            attn = jax.nn.softmax(q @ k.T / (dh ** 0.5), axis=-1)
            heads.append(attn @ v)
        outs.append(jnp.concatenate(heads, axis=-1)[None])
    return jnp.concatenate(outs, axis=0)


if __name__ == "__main__":
    # Module config: d=32, n_heads=2 -> d_head=16.  Input: batch=2, seq=8, d=32.
    B, S, D, H = 2, 8, 32, 2
    dh = D // H

    key = jax.random.PRNGKey(0)
    kx, kwq, kbq, kwk, kbk, kwv, kbv = jax.random.split(key, 7)

    x = jax.random.normal(kx, (B, S, D), dtype=jnp.float32)
    # Deterministic synthetic parameters (per-head Linear(d_head, d_head)).
    wq = 0.1 * jax.random.normal(kwq, (H, dh, dh), dtype=jnp.float32)
    bq = 0.1 * jax.random.normal(kbq, (H, dh), dtype=jnp.float32)
    wk = 0.1 * jax.random.normal(kwk, (H, dh, dh), dtype=jnp.float32)
    bk = 0.1 * jax.random.normal(kbk, (H, dh), dtype=jnp.float32)
    wv = 0.1 * jax.random.normal(kwv, (H, dh, dh), dtype=jnp.float32)
    bv = 0.1 * jax.random.normal(kbv, (H, dh), dtype=jnp.float32)

    # Pack once (init-time), NOT inside the per-call forward path.
    w_packed, b_packed = pack_msa_params(wq, bq, wk, bk, wv, bv)

    out = jax.block_until_ready(msa_forward(x, w_packed, b_packed, n_heads=H))
    ref = _reference(x, wq, bq, wk, bk, wv, bv, H)

    assert out.shape == (B, S, D), out.shape
    # Softmax uses an exact reciprocal now; the tolerance accounts only for the
    # bf16 MXU operands (projection and attn@v), not the softmax math.
    assert jnp.allclose(out, ref, rtol=2e-2, atol=2e-2), "mismatch vs reference"

    print("KERNEL_OK")
</pallas_src>

<mosaic_0001>
module attributes {stable_mosaic.version = 11 : i64} {
  func.func @_msa_kernel(%arg0: memref<2x8x32xf32, #tpu.memory_space<vmem>>, %arg1: memref<32x96xbf16, #tpu.memory_space<vmem>>, %arg2: memref<1x96xf32, #tpu.memory_space<vmem>>, %arg3: memref<2x8x32xf32, #tpu.memory_space<vmem>>) attributes {dimension_semantics = [], scalar_prefetch = 0 : i64, scratch_operands = 0 : i64, tpu.core_type = #tpu.core_type<tc>} {
    %c0 = arith.constant 0 : index
    %c0_0 = arith.constant 0 : index
    %c0_1 = arith.constant 0 : index
    %0 = vector.load %arg0[%c0, %c0_0, %c0_1] : memref<2x8x32xf32, #tpu.memory_space<vmem>>, vector<2x8x32xf32>
    %1 = vector.shape_cast %0 : vector<2x8x32xf32> to vector<16x32xf32>
    %2 = arith.truncf %1 : vector<16x32xf32> to vector<16x32xbf16>
    %c0_2 = arith.constant 0 : index
    %c0_3 = arith.constant 0 : index
    %3 = vector.load %arg1[%c0_2, %c0_3] : memref<32x96xbf16, #tpu.memory_space<vmem>>, vector<32x96xbf16>
    %cst = arith.constant dense<0.000000e+00> : vector<16x96xf32>
    %4 = tpu.matmul %2, %3, %cst {dimension_numbers = #tpu.dot_dimension_numbers<[1], [0], [0], [1], [0, 0, 1, 1], [], []>} : vector<16x32xbf16>, vector<32x96xbf16>, vector<16x96xf32> -> vector<16x96xf32>
    %c0_4 = arith.constant 0 : index
    %c0_5 = arith.constant 0 : index
    %5 = vector.load %arg2[%c0_4, %c0_5] : memref<1x96xf32, #tpu.memory_space<vmem>>, vector<1x96xf32>
    %6 = vector.broadcast %5 : vector<1x96xf32> to vector<16x96xf32>
    %7 = arith.addf %4, %6 : vector<16x96xf32>
    %8 = vector.extract_strided_slice %7 {offsets = [0, 0], sizes = [16, 16], strides = [1, 1]} : vector<16x96xf32> to vector<16x16xf32>
    %9 = vector.shape_cast %8 : vector<16x16xf32> to vector<1x16x16xf32>
    %10 = vector.extract_strided_slice %7 {offsets = [0, 16], sizes = [16, 16], strides = [1, 1]} : vector<16x96xf32> to vector<16x16xf32>
    %11 = vector.shape_cast %10 : vector<16x16xf32> to vector<1x16x16xf32>
    %12 = tpu.concatenate %9, %11 in 0 : vector<1x16x16xf32>, vector<1x16x16xf32> -> vector<2x16x16xf32>
    %13 = vector.shape_cast %12 : vector<2x16x16xf32> to vector<4x8x16xf32>
    %14 = vector.extract_strided_slice %7 {offsets = [0, 32], sizes = [16, 16], strides = [1, 1]} : vector<16x96xf32> to vector<16x16xf32>
    %15 = vector.shape_cast %14 : vector<16x16xf32> to vector<1x16x16xf32>
    %16 = vector.extract_strided_slice %7 {offsets = [0, 48], sizes = [16, 16], strides = [1, 1]} : vector<16x96xf32> to vector<16x16xf32>
    %17 = vector.shape_cast %16 : vector<16x16xf32> to vector<1x16x16xf32>
    %18 = tpu.concatenate %15, %17 in 0 : vector<1x16x16xf32>, vector<1x16x16xf32> -> vector<2x16x16xf32>
    %19 = vector.shape_cast %18 : vector<2x16x16xf32> to vector<4x8x16xf32>
    %20 = vector.extract_strided_slice %7 {offsets = [0, 64], sizes = [16, 16], strides = [1, 1]} : vector<16x96xf32> to vector<16x16xf32>
    %21 = vector.shape_cast %20 : vector<16x16xf32> to vector<1x16x16xf32>
    %22 = vector.extract_strided_slice %7 {offsets = [0, 80], sizes = [16, 16], strides = [1, 1]} : vector<16x96xf32> to vector<16x16xf32>
    %23 = vector.shape_cast %22 : vector<16x16xf32> to vector<1x16x16xf32>
    %24 = tpu.concatenate %21, %23 in 0 : vector<1x16x16xf32>, vector<1x16x16xf32> -> vector<2x16x16xf32>
    %25 = vector.shape_cast %24 : vector<2x16x16xf32> to vector<4x8x16xf32>
    "tpu.trace_start"() <{level = 10 : i32, message = "gqd,gkd->gqk"}> : () -> ()
    %cst_6 = arith.constant dense<0.000000e+00> : vector<4x8x8xf32>
    %26 = tpu.matmul %13, %19, %cst_6 {dimension_numbers = #tpu.dot_dimension_numbers<[2], [2], [1], [1], [0, 0, 0, 1, 1, 1], [0], [0]>} : vector<4x8x16xf32>, vector<4x8x16xf32>, vector<4x8x8xf32> -> vector<4x8x8xf32>
    "tpu.trace_stop"() : () -> ()
    %cst_7 = arith.constant dense<0xFF800000> : vector<4x8xf32>
    %27 = vector.multi_reduction <maximumf>, %26, %cst_7 [2] : vector<4x8x8xf32> to vector<4x8xf32>
    %28 = vector.shape_cast %27 : vector<4x8xf32> to vector<4x8x1xf32>
    %29 = vector.broadcast %28 : vector<4x8x1xf32> to vector<4x8x8xf32>
    %30 = arith.subf %26, %29 : vector<4x8x8xf32>
    %31 = math.exp %30 : vector<4x8x8xf32>
    %cst_8 = arith.constant dense<0.000000e+00> : vector<4x8xf32>
    %32 = vector.multi_reduction <add>, %31, %cst_8 [2] : vector<4x8x8xf32> to vector<4x8xf32>
    %33 = vector.shape_cast %32 : vector<4x8xf32> to vector<4x8x1xf32>
    %34 = tpu.reciprocal %33 : vector<4x8x1xf32> -> vector<4x8x1xf32>
    %35 = vector.broadcast %34 : vector<4x8x1xf32> to vector<4x8x8xf32>
    %36 = arith.mulf %31, %35 : vector<4x8x8xf32>
    %37 = arith.truncf %36 : vector<4x8x8xf32> to vector<4x8x8xbf16>
    %38 = arith.truncf %25 : vector<4x8x16xf32> to vector<4x8x16xbf16>
    "tpu.trace_start"() <{level = 10 : i32, message = "gqk,gkd->gqd"}> : () -> ()
    %cst_9 = arith.constant dense<0.000000e+00> : vector<4x8x16xf32>
    %39 = tpu.matmul %37, %38, %cst_9 {dimension_numbers = #tpu.dot_dimension_numbers<[2], [1], [1], [2], [0, 0, 0, 1, 1, 2], [0], [0]>} : vector<4x8x8xbf16>, vector<4x8x16xbf16>, vector<4x8x16xf32> -> vector<4x8x16xf32>
    "tpu.trace_stop"() : () -> ()
    %40 = vector.extract_strided_slice %39 {offsets = [0, 0, 0], sizes = [2, 8, 16], strides = [1, 1, 1]} : vector<4x8x16xf32> to vector<2x8x16xf32>
    %41 = vector.extract_strided_slice %39 {offsets = [2, 0, 0], sizes = [2, 8, 16], strides = [1, 1, 1]} : vector<4x8x16xf32> to vector<2x8x16xf32>
    %42 = tpu.concatenate %40, %41 in 2 : vector<2x8x16xf32>, vector<2x8x16xf32> -> vector<2x8x32xf32>
    %c0_10 = arith.constant 0 : index
    %c0_11 = arith.constant 0 : index
    %c0_12 = arith.constant 0 : index
    %43 = vector.load %arg3[%c0_10, %c0_11, %c0_12] : memref<2x8x32xf32, #tpu.memory_space<vmem>>, vector<2x8x32xf32>
    tpu.vector_store %arg3[%c0_10, %c0_11, %c0_12], %42 {strides = array<i32>} : memref<2x8x32xf32, #tpu.memory_space<vmem>>, vector<2x8x32xf32>,
    return
  }
}

</mosaic_0001>

<llo_original>
// kernel: msa_forward.1
$region0: #{msa_forward.1}
  #allocation0 [shape = 'u32[]', space=smem, size = 0x4, offset = 0x4, fixed_abs, tag = 'smem constant byte address 0x4 - core index']
  #allocation1 [shape = 'u32[72,128]{1,0:T(1,128)}', space=vmem, size = 0x9000, scoped, tag = 'internal scratch']
  %s0 = inlined_call_operand.hbm [shape: f32[2,8,32], index: 0, kind: input, shape index: {}]
  %s1 = inlined_call_operand.hbm [shape: bf16[32,96], index: 1, kind: input, shape index: {}]
  %s2 = inlined_call_operand.vmem [shape: f32[1,96], index: 2, kind: input, shape index: {}]
  %s3 = inlined_call_operand.hbm [shape: f32[2,8,32], index: 3, kind: output, shape index: {}]
  %s4 = sld [smem:[#allocation0]]
  $region30: #{msa_forward.1} parent=0
    _
  %s6 = ssub.s32 1, %s4
  %s7 = scalar_select 0, %s6, %s4
  $region1: #{msa_forward.1} parent=0
    #allocation2 [shape = 'u8[8192]{0}', space=vmem, size = 0x2000, scoped, tag = 'input window, operand 0, single buffered']
    #allocation3 [shape = 's32[1]{0}', space=sflag, size = 0x4, scoped, tag = 'scoped memory for msa_forward.1']
    #allocation4 [shape = 's32[1]{0}', space=sflag, size = 0x4, scoped, tag = 'scoped memory for msa_forward.1']
    #allocation5 [shape = 'u8[8192]{0}', space=vmem, size = 0x2000, scoped, tag = 'input window, operand 1, single buffered']
    #allocation6 [shape = 's32[1]{0}', space=sflag, size = 0x4, scoped, tag = 'scoped memory for msa_forward.1']
    #allocation7 [shape = 'u8[8192]{0}', space=vmem, size = 0x2000, scoped, tag = 'output window, operand 0, single buffered']
    %8 = vsyncpa [#allocation3], 0
    %9 = vsyncpa [#allocation6], 0
    %10 = vsyncpa [#allocation4], 0
    // Predicated region
    $region2: #{msa_forward.1} parent=1 // pred_check
      _
    $region3: #{msa_forward.1} parent=1 // pred_check_branch
      %12 = sbr.rel (0) target = $region5
    $region4: #{msa_forward.1} parent=1 // pred_region
      %14 = vsyncadd [#allocation3], 0
      %s15 = sshll.u32 %s0, 4
      %s16 = int_to_ptr.hbm [resolvable:$true] %s15
      %s17 = sshll.u32 [#allocation2], 4
      %s18 = int_to_ptr.vmem [resolvable:$true] %s17
      %23 = dma.hbm_to_vmem [thread:$0]  %s16, 256, %s18, [#allocation3], 128, 128, 8
    $region5: #{msa_forward.1} parent=1 // pred_fallthru
      _
    // Predicated region
    $region6: #{msa_forward.1} parent=1 // pred_check
      _
    $region7: #{msa_forward.1} parent=1 // pred_check_branch
      %25 = sbr.rel (0) target = $region9
    $region8: #{msa_forward.1} parent=1 // pred_region
      %27 = vsyncadd [#allocation6], 0
      %s28 = sshll.u32 %s1, 4
      %s29 = int_to_ptr.hbm [resolvable:$true] %s28
      %s30 = sshll.u32 [#allocation5], 4
      %s31 = int_to_ptr.vmem [resolvable:$true] %s30
      %36 = dma.hbm_to_vmem [thread:$0]  %s29, 256, %s31, [#allocation6], 64, 64, 4
    $region9: #{msa_forward.1} parent=1 // pred_fallthru
      _
    // Predicated region
    $region10: #{msa_forward.1} parent=1 // pred_check
      _
    $region11: #{msa_forward.1} parent=1 // pred_check_branch
      %38 = sbr.rel (0) target = $region13
    $region12: #{msa_forward.1} parent=1 // pred_region
      _
    $region13: #{msa_forward.1} parent=1 // pred_fallthru
      _
    // Predicated region
    $region14: #{msa_forward.1} parent=1 // pred_check
      _
    $region15: #{msa_forward.1} parent=1 // pred_check_branch
      %40 = sbr.rel (0) target = $region17
    $region16: #{msa_forward.1} parent=1 // pred_region
      %42 = dma.done [#allocation3], 256
    $region17: #{msa_forward.1} parent=1 // pred_fallthru
      _
    // Predicated region
    $region18: #{msa_forward.1} parent=1 // pred_check
      _
    $region19: #{msa_forward.1} parent=1 // pred_check_branch
      %44 = sbr.rel (0) target = $region21
    $region20: #{msa_forward.1} parent=1 // pred_region
      %46 = dma.done [#allocation6], 256
    $region21: #{msa_forward.1} parent=1 // pred_fallthru
      _
    %v48 = vld [vmem:[#allocation2] sm:$0xff]
    %v49 = vld [vmem:[#allocation2 + $0x8] sm:$0xff]
    %v50 = vpack.c.bf16 %v49, %v48
    %v51 = vld [vmem:[#allocation5] sm:$0xf]
    %v52 = vld [vmem:[#allocation5 + $0x4] sm:$0xf]
    %v53 = vld [vmem:[#allocation5 + $0x8] sm:$0xf]
    %v54 = vld [vmem:[#allocation5 + $0xc] sm:$0xf]
    %v55 = vld [vmem:[%s2] sm:$0x1]
    %v57 = vperm.slane %v55, 0
    %v63 = vunpack.c.l.b16 %v51
    %v64 = vunpack.c.l.b16 %v52
    %v65 = vunpack.c.l.b16 %v53
    %v66 = vunpack.c.l.b16 %v54
    %v67 = vpack.c.b16 %v64, %v63
    %v68 = vpack.c.b16 %v66, %v65
    %vm71 = vcmask 261120
    %v73 = vsel %vm71, %v50, 0
    %75 = vmatpush.bf16.msra.mxu0 0
    %76 = vmatpush.bf16.msra.mxu0 0
    %77 = vmatpush.bf16.msra.mxu0 0
    %78 = vmatpush.bf16.msra.mxu0 0
    %79 = vmatpush.bf16.msra.mxu0 0
    %80 = vmatpush.bf16.msra.mxu0 0
    %81 = vmatpush.bf16.msra.mxu0 %v68
    %82 = vmatpush.bf16.msra.mxu0 %v67
    %83 = vmatmul.bf16.gmra.mxu0 %v73
    %v84 = vpop.f32.mrf.mxu0
    %v85 = vadd.f32 %v57, %v84
    %v86 = vpop.f32.mrf.mxu0
    %v87 = vadd.f32 %v57, %v86
    %88 = vdwg.mxu0
    %91 = vrot.lane.b32.xlu0 %v85, 112
    %v92 = vpop.permute.xlu0 %91
    %93 = vrot.lane.b32.xlu0 %v87, 112
    %v94 = vpop.permute.xlu0 %93
    %97 = vrot.lane.b32.xlu0 %v85, 96
    %v98 = vpop.permute.xlu0 %97
    %vm99 = vcmask 130048
    %v100 = vsel %vm99, %v85, 0
    %v102 = vsel %vm99, %v98, 0
    %104 = vmatpush.xpose.msra.mxu0 0.0
    %105 = vmatpush.xpose.msra.mxu0 0.0
    %106 = vmatpush.xpose.msra.mxu0 0.0
    %107 = vmatpush.xpose.msra.mxu0 0.0
    %108 = vmatpush.xpose.msra.mxu0 0.0
    %109 = vmatpush.xpose.msra.mxu0 0.0
    %110 = vmatpush.xpose.msra.mxu0 0.0
    %111 = vmatpush.xpose.msra.mxu0 0.0
    %112 = vmatpush.xpose.msra.mxu0 0.0
    %113 = vmatpush.xpose.msra.mxu0 0.0
    %114 = vmatpush.xpose.msra.mxu0 0.0
    %115 = vmatpush.xpose.msra.mxu0 0.0
    %116 = vmatpush.xpose.msra.mxu0 0.0
    %117 = vmatpush.xpose.msra.mxu0 0.0
    %118 = vmatpush.xpose.msra.mxu0 0.0
    %119 = vmatpush.xpose.msra.mxu0 %v102
    %120 = vmatmul.f32.gmra.mxu0 %v100
    %v121 = vpop.f32.mrf.mxu0
    %v122 = vadd.f32 0.0, %v121
    %123 = vdwg.mxu0
    %124 = vrot.lane.b32.xlu0 %v87, 96
    %v125 = vpop.permute.xlu0 %124
    %v126 = vsel %vm99, %v87, 0
    %v128 = vsel %vm99, %v125, 0
    %130 = vmatpush.xpose.msra.mxu0 0.0
    %131 = vmatpush.xpose.msra.mxu0 0.0
    %132 = vmatpush.xpose.msra.mxu0 0.0
    %133 = vmatpush.xpose.msra.mxu0 0.0
    %134 = vmatpush.xpose.msra.mxu0 0.0
    %135 = vmatpush.xpose.msra.mxu0 0.0
    %136 = vmatpush.xpose.msra.mxu0 0.0
    %137 = vmatpush.xpose.msra.mxu0 0.0
    %138 = vmatpush.xpose.msra.mxu0 0.0
    %139 = vmatpush.xpose.msra.mxu0 0.0
    %140 = vmatpush.xpose.msra.mxu0 0.0
    %141 = vmatpush.xpose.msra.mxu0 0.0
    %142 = vmatpush.xpose.msra.mxu0 0.0
    %143 = vmatpush.xpose.msra.mxu0 0.0
    %144 = vmatpush.xpose.msra.mxu0 0.0
    %145 = vmatpush.xpose.msra.mxu0 %v128
    %146 = vmatmul.f32.gmra.mxu0 %v126
    %v147 = vpop.f32.mrf.mxu0
    %v148 = vadd.f32 0.0, %v147
    %149 = vdwg.mxu0
    %150 = vrot.lane.b32.xlu0 %v92, 96
    %v151 = vpop.permute.xlu0 %150
    %v152 = vsel %vm99, %v92, 0
    %v154 = vsel %vm99, %v151, 0
    %156 = vmatpush.xpose.msra.mxu0 0.0
    %157 = vmatpush.xpose.msra.mxu0 0.0
    %158 = vmatpush.xpose.msra.mxu0 0.0
    %159 = vmatpush.xpose.msra.mxu0 0.0
    %160 = vmatpush.xpose.msra.mxu0 0.0
    %161 = vmatpush.xpose.msra.mxu0 0.0
    %162 = vmatpush.xpose.msra.mxu0 0.0
    %163 = vmatpush.xpose.msra.mxu0 0.0
    %164 = vmatpush.xpose.msra.mxu0 0.0
    %165 = vmatpush.xpose.msra.mxu0 0.0
    %166 = vmatpush.xpose.msra.mxu0 0.0
    %167 = vmatpush.xpose.msra.mxu0 0.0
    %168 = vmatpush.xpose.msra.mxu0 0.0
    %169 = vmatpush.xpose.msra.mxu0 0.0
    %170 = vmatpush.xpose.msra.mxu0 0.0
    %171 = vmatpush.xpose.msra.mxu0 %v154
    %172 = vmatmul.f32.gmra.mxu0 %v152
    %v173 = vpop.f32.mrf.mxu0
    %v174 = vadd.f32 0.0, %v173
    %175 = vdwg.mxu0
    %176 = vrot.lane.b32.xlu0 %v94, 96
    %v177 = vpop.permute.xlu0 %176
    %v178 = vsel %vm99, %v94, 0
    %v180 = vsel %vm99, %v177, 0
    %182 = vmatpush.xpose.msra.mxu0 0.0
    %183 = vmatpush.xpose.msra.mxu0 0.0
    %184 = vmatpush.xpose.msra.mxu0 0.0
    %185 = vmatpush.xpose.msra.mxu0 0.0
    %186 = vmatpush.xpose.msra.mxu0 0.0
    %187 = vmatpush.xpose.msra.mxu0 0.0
    %188 = vmatpush.xpose.msra.mxu0 0.0
    %189 = vmatpush.xpose.msra.mxu0 0.0
    %190 = vmatpush.xpose.msra.mxu0 0.0
    %191 = vmatpush.xpose.msra.mxu0 0.0
    %192 = vmatpush.xpose.msra.mxu0 0.0
    %193 = vmatpush.xpose.msra.mxu0 0.0
    %194 = vmatpush.xpose.msra.mxu0 0.0
    %195 = vmatpush.xpose.msra.mxu0 0.0
    %196 = vmatpush.xpose.msra.mxu0 0.0
    %197 = vmatpush.xpose.msra.mxu0 %v180
    %198 = vmatmul.f32.gmra.mxu0 %v178
    %v199 = vpop.f32.mrf.mxu0
    %v200 = vadd.f32 0.0, %v199
    %201 = vdwg.mxu0
    %vm202 = vcmask 64512
    %v203 = vsel %vm202, %v122, -inf
    %204 = vmax.xlane.f32.xlu0 %v203
    %v205 = vpop.xlane.xlu0 %204
    %v206 = vsel %vm202, %v148, -inf
    %207 = vmax.xlane.f32.xlu0 %v206
    %v208 = vpop.xlane.xlu0 %207
    %v209 = vsel %vm202, %v174, -inf
    %210 = vmax.xlane.f32.xlu0 %v209
    %v211 = vpop.xlane.xlu0 %210
    %v212 = vsel %vm202, %v200, -inf
    %213 = vmax.xlane.f32.xlu0 %v212
    %v214 = vpop.xlane.xlu0 %213
    %v215 = vsub.f32 %v122, %v205
    %v216 = vsub.f32 %v148, %v208
    %v217 = vsub.f32 %v174, %v211
    %v218 = vsub.f32 %v200, %v214
    %v219 = vmul.f32 %v215, 1.442695
    %v220 = vpow.pop %v219
    %v221 = vmul.f32 %v216, 1.442695
    %v222 = vpow.pop %v221
    %v223 = vmul.f32 %v217, 1.442695
    %v224 = vpow.pop %v223
    %v225 = vmul.f32 %v218, 1.442695
    %v226 = vpow.pop %v225
    %v227 = vsel %vm202, %v220, 0.0
    %228 = vadd.xlane.f32.xlu0 %v227
    %v229 = vpop.xlane.xlu0 %228
    %v230 = vsel %vm202, %v222, 0.0
    %231 = vadd.xlane.f32.xlu0 %v230
    %v232 = vpop.xlane.xlu0 %231
    %v233 = vsel %vm202, %v224, 0.0
    %234 = vadd.xlane.f32.xlu0 %v233
    %v235 = vpop.xlane.xlu0 %234
    %v236 = vsel %vm202, %v226, 0.0
    %237 = vadd.xlane.f32.xlu0 %v236
    %v238 = vpop.xlane.xlu0 %237
    %v239 = vrcp.pop %v229
    %v240 = vmul.f32 %v229, %v239
    %v241 = vsub.f32 1.0, %v240
    %v242 = vmul.f32 %v239, %v241
    %v243 = vadd.f32 %v239, %v242
    %vm244 = vweird.f32 %v229
    %vm245 = vweird.f32 %v239
    %vm246 = vmor %vm244, %vm245
    %v247 = vsel %vm246, %v239, %v243
    %v248 = vand.u32 2147483647, %v229
    %vm249 = vcmp.eq.f32.partialorder %v248, 8.507059e+37
    %v250 = vand.u32 %v229, 2147483648
    %v251 = vor.u32 1.1754944e-38, %v250
    %v252 = vsel %vm249, %v251, %v247
    %v253 = vrcp.pop %v232
    %v254 = vmul.f32 %v232, %v253
    %v255 = vsub.f32 1.0, %v254
    %v256 = vmul.f32 %v253, %v255
    %v257 = vadd.f32 %v253, %v256
    %vm258 = vweird.f32 %v232
    %vm259 = vweird.f32 %v253
    %vm260 = vmor %vm258, %vm259
    %v261 = vsel %vm260, %v253, %v257
    %v262 = vand.u32 2147483647, %v232
    %vm263 = vcmp.eq.f32.partialorder %v262, 8.507059e+37
    %v264 = vand.u32 %v232, 2147483648
    %v265 = vor.u32 1.1754944e-38, %v264
    %v266 = vsel %vm263, %v265, %v261
    %v267 = vrcp.pop %v235
    %v268 = vmul.f32 %v235, %v267
    %v269 = vsub.f32 1.0, %v268
    %v270 = vmul.f32 %v267, %v269
    %v271 = vadd.f32 %v267, %v270
    %vm272 = vweird.f32 %v235
    %vm273 = vweird.f32 %v267
    %vm274 = vmor %vm272, %vm273
    %v275 = vsel %vm274, %v267, %v271
    %v276 = vand.u32 2147483647, %v235
    %vm277 = vcmp.eq.f32.partialorder %v276, 8.507059e+37
    %v278 = vand.u32 %v235, 2147483648
    %v279 = vor.u32 1.1754944e-38, %v278
    %v280 = vsel %vm277, %v279, %v275
    %v281 = vrcp.pop %v238
    %v282 = vmul.f32 %v238, %v281
    %v283 = vsub.f32 1.0, %v282
    %v284 = vmul.f32 %v281, %v283
    %v285 = vadd.f32 %v281, %v284
    %vm286 = vweird.f32 %v238
    %vm287 = vweird.f32 %v281
    %vm288 = vmor %vm286, %vm287
    %v289 = vsel %vm288, %v281, %v285
    %v290 = vand.u32 2147483647, %v238
    %vm291 = vcmp.eq.f32.partialorder %v290, 8.507059e+37
    %v292 = vand.u32 %v238, 2147483648
    %v293 = vor.u32 1.1754944e-38, %v292
    %v294 = vsel %vm291, %v293, %v289
    %v295 = vmul.f32 %v220, %v252
    %v296 = vmul.f32 %v222, %v266
    %v297 = vmul.f32 %v224, %v280
    %v298 = vmul.f32 %v226, %v294
    %v299 = vpack.c.bf16 %v295, %v295
    %v300 = vpack.c.bf16 %v296, %v296
    %v301 = vpack.c.bf16 %v297, %v297
    %v302 = vpack.c.bf16 %v298, %v298
    %v303 = vpack.c.bf16 %v85, %v85
    %v304 = vpack.c.bf16 %v87, %v87
    %v305 = vpack.c.bf16 %v92, %v92
    %v306 = vpack.c.bf16 %v94, %v94
    %v308 = vunpack.c.l.b16 %v303
    %v309 = vpack.c.b16 %v308, %v308
    %310 = vrot.lane.b32.xlu0 %v309, 64
    %v311 = vpop.permute.xlu0 %310
    %v313 = vsel %vm202, %v299, 0
    %vm315 = vcmask 1043456
    %v317 = vsel %vm315, %v311, 0
    %319 = vmatpush.bf16.msra.mxu0 0
    %320 = vmatpush.bf16.msra.mxu0 0
    %321 = vmatpush.bf16.msra.mxu0 0
    %322 = vmatpush.bf16.msra.mxu0 0
    %323 = vmatpush.bf16.msra.mxu0 0
    %324 = vmatpush.bf16.msra.mxu0 0
    %325 = vmatpush.bf16.msra.mxu0 0
    %326 = vmatpush.bf16.msra.mxu0 %v317
    %327 = vmatmul.bf16.gmra.mxu0 %v313
    %v328 = vpop.f32.mrf.mxu0
    %v329 = vadd.f32 0.0, %v328
    %v330 = vpop.f32.mrf.mxu0
    %331 = vdwg.mxu0
    %v333 = vunpack.c.l.b16 %v304
    %v334 = vpack.c.b16 %v333, %v333
    %335 = vrot.lane.b32.xlu0 %v334, 64
    %v336 = vpop.permute.xlu0 %335
    %v338 = vsel %vm202, %v300, 0
    %v341 = vsel %vm315, %v336, 0
    %343 = vmatpush.bf16.msra.mxu0 0
    %344 = vmatpush.bf16.msra.mxu0 0
    %345 = vmatpush.bf16.msra.mxu0 0
    %346 = vmatpush.bf16.msra.mxu0 0
    %347 = vmatpush.bf16.msra.mxu0 0
    %348 = vmatpush.bf16.msra.mxu0 0
    %349 = vmatpush.bf16.msra.mxu0 0
    %350 = vmatpush.bf16.msra.mxu0 %v341
    %351 = vmatmul.bf16.gmra.mxu0 %v338
    %v352 = vpop.f32.mrf.mxu0
    %v353 = vadd.f32 0.0, %v352
    %v354 = vpop.f32.mrf.mxu0
    %355 = vdwg.mxu0
    %v357 = vunpack.c.l.b16 %v305
    %v358 = vpack.c.b16 %v357, %v357
    %359 = vrot.lane.b32.xlu0 %v358, 64
    %v360 = vpop.permute.xlu0 %359
    %v362 = vsel %vm202, %v301, 0
    %v365 = vsel %vm315, %v360, 0
    %367 = vmatpush.bf16.msra.mxu0 0
    %368 = vmatpush.bf16.msra.mxu0 0
    %369 = vmatpush.bf16.msra.mxu0 0
    %370 = vmatpush.bf16.msra.mxu0 0
    %371 = vmatpush.bf16.msra.mxu0 0
    %372 = vmatpush.bf16.msra.mxu0 0
    %373 = vmatpush.bf16.msra.mxu0 0
    %374 = vmatpush.bf16.msra.mxu0 %v365
    %375 = vmatmul.bf16.gmra.mxu0 %v362
    %v376 = vpop.f32.mrf.mxu0
    %v377 = vadd.f32 0.0, %v376
    %v378 = vpop.f32.mrf.mxu0
    %379 = vdwg.mxu0
    %v381 = vunpack.c.l.b16 %v306
    %v382 = vpack.c.b16 %v381, %v381
    %383 = vrot.lane.b32.xlu0 %v382, 64
    %v384 = vpop.permute.xlu0 %383
    %v386 = vsel %vm202, %v302, 0
    %v389 = vsel %vm315, %v384, 0
    %391 = vmatpush.bf16.msra.mxu0 0
    %392 = vmatpush.bf16.msra.mxu0 0
    %393 = vmatpush.bf16.msra.mxu0 0
    %394 = vmatpush.bf16.msra.mxu0 0
    %395 = vmatpush.bf16.msra.mxu0 0
    %396 = vmatpush.bf16.msra.mxu0 0
    %397 = vmatpush.bf16.msra.mxu0 0
    %398 = vmatpush.bf16.msra.mxu0 %v389
    %399 = vmatmul.bf16.gmra.mxu0 %v386
    %v400 = vpop.f32.mrf.mxu0
    %v401 = vadd.f32 0.0, %v400
    %v402 = vpop.f32.mrf.mxu0
    %403 = vdwg.mxu0
    %406 = vrot.lane.b32.xlu0 %v377, 16
    %v407 = vpop.permute.xlu0 %406
    %408 = vrot.lane.b32.xlu0 %v401, 16
    %v409 = vpop.permute.xlu0 %408
    %v412 = vsel %vm99, %v329, %v407
    %v413 = vsel %vm99, %v353, %v409
    %414 = vst.msk [vmem:[#allocation7] sm:$0xff] %vm71, %v412
    %415 = vst.msk [vmem:[#allocation7 + $0x8] sm:$0xff] %vm71, %v413
    // Predicated region
    $region22: #{msa_forward.1} parent=1 // pred_check
      _
    $region23: #{msa_forward.1} parent=1 // pred_check_branch
      %417 = sbr.rel (0) target = $region25
    $region24: #{msa_forward.1} parent=1 // pred_region
      %419 = vsyncadd [#allocation4], 0
      %s420 = sshll.u32 [#allocation7], 4
      %s421 = int_to_ptr.vmem [resolvable:$true] %s420
      %s422 = sshll.u32 %s3, 4
      %s423 = int_to_ptr.hbm [resolvable:$true] %s422
      %428 = dma.vmem_to_hbm [thread:$0]  %s421, 256, %s423, [#allocation4], 128, 128, 8
    $region25: #{msa_forward.1} parent=1 // pred_fallthru
      _
    // Predicated region
    $region26: #{msa_forward.1} parent=1 // pred_check
      _
    $region27: #{msa_forward.1} parent=1 // pred_check_branch
      %430 = sbr.rel (0) target = $region29
    $region28: #{msa_forward.1} parent=1 // pred_region
      %432 = dma.done [#allocation4], 256
    $region29: #{msa_forward.1} parent=1 // pred_fallthru
      _
    %433 = vsyncpa [#allocation3], 1
    %434 = vsyncpa [#allocation6], 1
    %435 = vsyncpa [#allocation4], 1

</llo_original>
